<compile_context>
chip_gen: v6e
topology: v6e:2x2x1
jax: 0.10.0
libtpu: 0.0.40
codegen_flags: <defaults>
</compile_context>

<pallas_src>
import jax
import jax.numpy as jnp
from jax.experimental import pallas as pl
from jax.experimental.pallas import tpu as pltpu

_TARGET_BLOCK_BYTES = 6 * 1024 * 1024        # ~6 MiB per block (x4 buffers ~= 24 MiB resident)
_VMEM_LIMIT_BYTES = 48 * 1024 * 1024         # explicit scoped-VMEM limit (<= 64 MiB v7x physical)
_LANE_CANDIDATES = (8192, 4096, 2048, 1024, 512, 256, 128)   # lane-dense last-dim widths
_TC_SPLIT_MIN_BYTES = 2 * 1024 * 1024        # split single-block cases >= 2 MiB across 2 TCs


def _relu_kernel(x_ref, o_ref):
    # ReLU == clamp(min=0). Single VPU op per vreg; kernel is DMA/HBM-bound.
    o_ref[...] = jnp.maximum(x_ref[...], 0)


def _relu_flat(x_flat, lane, itemsize, *, donate_input):
    """Run the Pallas kernel over a flat array whose size is a multiple of `lane`."""
    n = x_flat.size
    rows = n // lane
    x2d = x_flat.reshape(rows, lane)

    # ~6 MiB of rows per block; keep rows a multiple of 32 so packed sub-32-bit
    # dtypes (bf16/int8/fp8) tile cleanly if this kernel is reused for them.
    tile_rows = max(32, (_TARGET_BLOCK_BYTES // (lane * itemsize)) // 32 * 32)
    # If the whole array is smaller than one tile, the block equals the full dim
    # (satisfies the (8,128) rule even when rows isn't a multiple of 8).
    block_rows = min(tile_rows, rows)

    # v7x megacore: if the grid would collapse to (1,) but the array is non-trivial,
    # halve the block (rounded to a multiple of 32) so grid >= 2 and the "parallel"
    # axis can shard across both TensorCores (no-op on single-TC v5e/v6e).
    if block_rows == rows and rows >= 64 and n * itemsize >= _TC_SPLIT_MIN_BYTES:
        half = (rows + 1) // 2
        block_rows = ((half + 31) // 32) * 32

    # Ragged last block (when block_rows doesn't divide rows) is handled by Pallas;
    # elementwise, so the clipped tail never corrupts the valid region.
    grid = (pl.cdiv(rows, block_rows),)

    extra_kwargs = {}
    if donate_input:
        # Only safe when the caller donates x (input dead afterwards). The torch module
        # keeps the input for backward, so this is opt-in.
        extra_kwargs["input_output_aliases"] = {0: 0}

    out2d = pl.pallas_call(
        _relu_kernel,
        out_shape=jax.ShapeDtypeStruct((rows, lane), x_flat.dtype),
        grid_spec=pltpu.PrefetchScalarGridSpec(
            num_scalar_prefetch=0,
            grid=grid,
            in_specs=[pl.BlockSpec((block_rows, lane), lambda i: (i, 0))],
            out_specs=pl.BlockSpec((block_rows, lane), lambda i: (i, 0)),
        ),
        compiler_params=pltpu.CompilerParams(
            # Single parallel axis -> sharded across v7x's 2 TensorCores; no-op on v5e/v6e.
            dimension_semantics=("parallel",),
            vmem_limit_bytes=_VMEM_LIMIT_BYTES,
        ),
        cost_estimate=pl.CostEstimate(
            flops=n, transcendentals=0, bytes_accessed=2 * n * itemsize),
        **extra_kwargs,
    )(x2d)
    return out2d.reshape(-1)


def relu(x, *, donate_input=False):
    """Elementwise ReLU matching torch `inp.clamp(min=0)`."""
    orig_shape = x.shape
    orig_dtype = x.dtype
    n = x.size
    if n == 0:
        return x
    itemsize = jnp.dtype(orig_dtype).itemsize

    # Pick the widest lane-dense last dim that divides the flat size -> reshape is free.
    lane = None
    for cand in _LANE_CANDIDATES:
        if n % cand == 0:
            lane = cand
            break

    x_flat = jnp.ravel(x)

    if lane is None:
        # Uncommon fallback: flat size not a multiple of 128. Avoid the old
        # jnp.pad + slice (two extra full HBM passes): run the kernel on the
        # 128-aligned prefix and compute the <=127-element tail on the VPU directly.
        n_main = (n // 128) * 128
        tail_out = jnp.maximum(x_flat[n_main:], 0)
        if n_main == 0:
            return tail_out.reshape(orig_shape)
        main_out = _relu_flat(x_flat[:n_main], 128, itemsize, donate_input=False)
        # TODO(synk): a fully single-pass ragged path would need in-kernel masked stores
        # over a manually DMA'd HBM ref (or a donated stitch buffer); concat is the
        # simple correct fallback for this uncommon case.
        return jnp.concatenate([main_out, tail_out]).reshape(orig_shape)

    out_flat = _relu_flat(x_flat, lane, itemsize, donate_input=donate_input)
    return out_flat.reshape(orig_shape)


if __name__ == "__main__":
    key = jax.random.PRNGKey(0)

    # NCHW-like small input consistent with "tensor of m units".
    x = jax.random.normal(key, (2, 4, 16, 16), dtype=jnp.float32)
    out = jax.block_until_ready(relu(x))
    ref = jnp.maximum(x, 0.0)
    assert out.shape == x.shape and out.dtype == x.dtype
    assert jnp.allclose(out, ref), "mismatch vs reference (aligned case)"

    # Non-128-aligned fallback path (prefix kernel + tail).
    x_odd = jax.random.normal(jax.random.PRNGKey(1), (13, 61), dtype=jnp.float32)
    out_odd = jax.block_until_ready(relu(x_odd))
    ref_odd = jnp.maximum(x_odd, 0.0)
    assert out_odd.shape == x_odd.shape and out_odd.dtype == x_odd.dtype
    assert jnp.allclose(out_odd, ref_odd), "mismatch vs reference (ragged case)"

    # Mid-size aligned input: exercises the two-TensorCore grid split and, via a jitted
    # donating wrapper, the input_output_aliases path.
    x_mid = jax.random.normal(jax.random.PRNGKey(2), (512, 1024), dtype=jnp.float32)
    ref_mid = jnp.maximum(x_mid, 0.0)
    relu_donating = jax.jit(relu, donate_argnums=(0,), static_argnames=("donate_input",))
    out_mid = jax.block_until_ready(relu_donating(x_mid, donate_input=True))
    assert out_mid.shape == (512, 1024) and out_mid.dtype == jnp.float32
    assert jnp.allclose(out_mid, ref_mid), "mismatch vs reference (donated / TC-split case)"

    print("KERNEL_OK")
</pallas_src>

<mosaic_0001>
module attributes {stable_mosaic.version = 11 : i64} {
  func.func @_relu_kernel(%arg0: i32, %arg1: memref<1x2048xf32, #tpu.memory_space<vmem>>, %arg2: memref<1x2048xf32, #tpu.memory_space<vmem>>) attributes {dimension_semantics = [#tpu.dimension_semantics<parallel>], iteration_bounds = array<i64: 1>, scalar_prefetch = 0 : i64, scratch_operands = 0 : i64, tpu.core_type = #tpu.core_type<tc>, window_params = [{transform_indices = @transform_0, window_bounds = array<i64: 1, 2048>}, {transform_indices = @transform_1, window_bounds = array<i64: 1, 2048>}]} {
    %c0 = arith.constant 0 : index
    %c0_0 = arith.constant 0 : index
    %0 = vector.load %arg1[%c0, %c0_0] : memref<1x2048xf32, #tpu.memory_space<vmem>>, vector<1x2048xf32>
    %cst = arith.constant 0.000000e+00 : f32
    %1 = vector.broadcast %cst : f32 to vector<1x2048xf32>
    %2 = arith.maximumf %0, %1 : vector<1x2048xf32>
    %c0_1 = arith.constant 0 : index
    %c0_2 = arith.constant 0 : index
    %3 = vector.load %arg2[%c0_1, %c0_2] : memref<1x2048xf32, #tpu.memory_space<vmem>>, vector<1x2048xf32>
    tpu.vector_store %arg2[%c0_1, %c0_2], %2 {strides = array<i32>} : memref<1x2048xf32, #tpu.memory_space<vmem>>, vector<1x2048xf32>,
    return
  }
  func.func @transform_0(%arg0: i32) -> (i32, i32) {
    %c0_i32 = arith.constant 0 : i32
    %c0_i32_0 = arith.constant 0 : i32
    return %arg0, %c0_i32 : i32, i32
  }
  func.func @transform_1(%arg0: i32) -> (i32, i32) {
    %c0_i32 = arith.constant 0 : i32
    %c0_i32_0 = arith.constant 0 : i32
    return %arg0, %c0_i32 : i32, i32
  }
}

</mosaic_0001>

<llo_original>
// kernel: tpu_custom_call.1
$region0: #{tpu_custom_call.1}
  #allocation0 [shape = 'u32[]', space=smem, size = 0x4, offset = 0x4, fixed_abs, tag = 'smem constant byte address 0x4 - core index']
  #allocation1 [shape = 'u32[144,128]{1,0:T(1,128)}', space=vmem, size = 0x12000, scoped, tag = 'internal scratch']
  %s0 = inlined_call_operand.hbm [shape: f32[1,2048], index: 0, kind: input, shape index: {}]
  %s1 = inlined_call_operand.hbm [shape: f32[1,2048], index: 1, kind: output, shape index: {}]
  %s2 = sld [smem:[#allocation0]]
  $region18: #{tpu_custom_call.1} parent=0
    _
  %s4 = ssub.s32 1, %s2
  %s5 = scalar_select 0, %s4, %s2
  $region1: #{tpu_custom_call.1} parent=0
    #allocation2 [shape = 'u8[8192]{0}', space=vmem, size = 0x2000, scoped, tag = 'input window, operand 0, single buffered']
    #allocation3 [shape = 's32[1]{0}', space=sflag, size = 0x4, scoped, tag = 'scoped memory for tpu_custom_call.1']
    #allocation4 [shape = 's32[1]{0}', space=sflag, size = 0x4, scoped, tag = 'scoped memory for tpu_custom_call.1']
    #allocation5 [shape = 'u8[8192]{0}', space=vmem, size = 0x2000, scoped, tag = 'output window, operand 0, single buffered']
    %6 = vsyncpa [#allocation3], 0
    %7 = vsyncpa [#allocation4], 0
    // Predicated region
    $region2: #{tpu_custom_call.1} parent=1 // pred_check
      _
    $region3: #{tpu_custom_call.1} parent=1 // pred_check_branch
      %9 = sbr.rel (0) target = $region5
    $region4: #{tpu_custom_call.1} parent=1 // pred_region
      %s11 = ssub.s32 256, 256
      %12 = vsyncadd [#allocation3], %s11
      %s14 = sshll.u32 [#allocation2], 4
      %s15 = int_to_ptr.vmem [resolvable:$true] %s14
      %17 = dma.hbm_to_vmem [thread:$0]  %s0, 256, %s15, [#allocation3]
    $region5: #{tpu_custom_call.1} parent=1 // pred_fallthru
      _
    // Predicated region
    $region6: #{tpu_custom_call.1} parent=1 // pred_check
      _
    $region7: #{tpu_custom_call.1} parent=1 // pred_check_branch
      %19 = sbr.rel (0) target = $region9
    $region8: #{tpu_custom_call.1} parent=1 // pred_region
      %20 = dma.done [#allocation3], 256
    $region9: #{tpu_custom_call.1} parent=1 // pred_fallthru
      _
    %v21 = vld [vmem:[#allocation2] sm:$0xff]
    %v22 = vld [vmem:[#allocation2 + $0x8] sm:$0xff]
    %v23 = vmax.f32 %v21, 0.0
    %v24 = vmax.f32 %v22, 0.0
    %25 = vst [vmem:[#allocation5] sm:$0xff] %v23
    %26 = vst [vmem:[#allocation5 + $0x8] sm:$0xff] %v24
    // Predicated region
    $region10: #{tpu_custom_call.1} parent=1 // pred_check
      _
    $region11: #{tpu_custom_call.1} parent=1 // pred_check_branch
      %28 = sbr.rel (0) target = $region13
    $region12: #{tpu_custom_call.1} parent=1 // pred_region
      %s30 = ssub.s32 256, 256
      %31 = vsyncadd [#allocation4], %s30
      %s33 = sshll.u32 [#allocation5], 4
      %s34 = int_to_ptr.vmem [resolvable:$true] %s33
      %36 = dma.vmem_to_hbm [thread:$0]  %s34, 256, %s1, [#allocation4]
    $region13: #{tpu_custom_call.1} parent=1 // pred_fallthru
      _
    // Predicated region
    $region14: #{tpu_custom_call.1} parent=1 // pred_check
      _
    $region15: #{tpu_custom_call.1} parent=1 // pred_check_branch
      %38 = sbr.rel (0) target = $region17
    $region16: #{tpu_custom_call.1} parent=1 // pred_region
      %39 = dma.done [#allocation4], 256
    $region17: #{tpu_custom_call.1} parent=1 // pred_fallthru
      _
    %40 = vsyncpa [#allocation3], 1
    %41 = vsyncpa [#allocation4], 1

</llo_original>
